<compile_context>
chip_gen: v7x
topology: tpu7x:2x2x1
jax: 0.10.0
libtpu: 0.0.40
codegen_flags: <defaults>
</compile_context>

<pallas_src>
import math

import jax
import jax.numpy as jnp
import numpy as np
from jax.experimental import pallas as pl
from jax.experimental.pallas import tpu as pltpu

_VMEM_LIMIT = 32 * 1024 * 1024  # > v5e 16 MiB scoped default, <= physical on all gens


def _round_up(a, b):
    return (a + b - 1) // b * b


# ---------------------------------------------------------------------------
# Kernel A: 1x1 conv (channel matmul) + AdaptiveMaxPool2d((k, k)), per image.
# ---------------------------------------------------------------------------
def _make_proj_pool_kernel(H, W, cin, ec, k):
    # Static AdaptiveMaxPool2d window boundaries (exact PyTorch semantics).
    def bounds(size):
        return [(int(math.floor(i * size / k)), int(math.ceil((i + 1) * size / k)))
                for i in range(k)]

    hb, wb = bounds(H), bounds(W)

    # TODO(synk): H-tile this per-image block (pool-window aligned chunks) for very
    # large feature maps so it stays within v7x's 64 MiB physical VMEM.
    def kernel(x_ref, w_ref, b_ref, o_ref):
        x = x_ref[0].reshape(H * W, cin)                                    # (H*W, Cin)
        y = jnp.dot(x, w_ref[...], preferred_element_type=jnp.float32) + b_ref[...]
        y3 = y.reshape(H, W, ec)
        for py, (sy, ey) in enumerate(hb):
            for px, (sx, ex) in enumerate(wb):
                win = y3[sy:ey, sx:ex, :]
                m = jnp.max(jnp.max(win, axis=0), axis=0, keepdims=True)    # (1, ec)
                idx = py * k + px
                o_ref[0, idx:idx + 1, :] = m.astype(o_ref.dtype)

    return kernel


def proj_pool(x_nhwc, w, b, k):
    """x_nhwc: (N, H, W, Cin); w: (Cin, ec); b: (ec,) -> (N, k*k, ec)."""
    N, H, W, cin = x_nhwc.shape
    ec = w.shape[1]
    kernel = _make_proj_pool_kernel(H, W, cin, ec, k)
    return pl.pallas_call(
        kernel,
        out_shape=jax.ShapeDtypeStruct((N, k * k, ec), jnp.float32),
        grid=(N,),
        in_specs=[
            pl.BlockSpec((1, H, W, cin), lambda i: (i, 0, 0, 0)),
            pl.BlockSpec((cin, ec), lambda i: (0, 0)),
            pl.BlockSpec((1, ec), lambda i: (0, 0)),
        ],
        out_specs=pl.BlockSpec((1, k * k, ec), lambda i: (i, 0, 0)),
        compiler_params=pltpu.CompilerParams(
            dimension_semantics=("parallel",), vmem_limit_bytes=_VMEM_LIMIT),
    )(x_nhwc.astype(jnp.float32), w.astype(jnp.float32),
      b.reshape(1, ec).astype(jnp.float32))


# ---------------------------------------------------------------------------
# Kernel B: fused LayerNorm (over last dim) + Linear, row-tiled.
# ---------------------------------------------------------------------------
def _ln_linear_kernel(x_ref, g_ref, bt_ref, w_ref, b_ref, o_ref):
    x = x_ref[...]
    mu = jnp.mean(x, axis=-1, keepdims=True)
    xc = x - mu
    var = jnp.mean(xc * xc, axis=-1, keepdims=True)
    xn = xc * jax.lax.rsqrt(var + 1e-5)
    xn = xn * g_ref[...] + bt_ref[...]
    y = jnp.dot(xn, w_ref[...], preferred_element_type=jnp.float32) + b_ref[...]
    o_ref[...] = y.astype(o_ref.dtype)


def ln_linear(x2d, gamma, beta, w, b, tm=512):
    """x2d: (M, Din); gamma/beta: (Din,); w: (Din, Dout); b: (Dout,) -> (M, Dout)."""
    M, din = x2d.shape
    dout = w.shape[1]
    TM = min(tm, _round_up(M, 8))          # whole problem in one block when small
    Mp = _round_up(M, TM)
    xp = jnp.pad(x2d, ((0, Mp - M), (0, 0))) if Mp != M else x2d
    out = pl.pallas_call(
        _ln_linear_kernel,
        out_shape=jax.ShapeDtypeStruct((Mp, dout), jnp.float32),
        grid=(Mp // TM,),
        in_specs=[
            pl.BlockSpec((TM, din), lambda i: (i, 0)),
            pl.BlockSpec((1, din), lambda i: (0, 0)),
            pl.BlockSpec((1, din), lambda i: (0, 0)),
            pl.BlockSpec((din, dout), lambda i: (0, 0)),
            pl.BlockSpec((1, dout), lambda i: (0, 0)),
        ],
        out_specs=pl.BlockSpec((TM, dout), lambda i: (i, 0)),
        compiler_params=pltpu.CompilerParams(
            dimension_semantics=("parallel",), vmem_limit_bytes=_VMEM_LIMIT),
    )(xp.astype(jnp.float32), gamma.reshape(1, din).astype(jnp.float32),
      beta.reshape(1, din).astype(jnp.float32), w.astype(jnp.float32),
      b.reshape(1, dout).astype(jnp.float32))
    return out[:M] if Mp != M else out


# ---------------------------------------------------------------------------
# Kernel C: multi-head attention + output projection + scale + residual, per image.
# ---------------------------------------------------------------------------
def _make_attn_kernel(nh, hc, ct, scale_val):
    inv = 1.0 / math.sqrt(hc)

    # TODO(synk): for scale=True (learned scalar), pass it as an SMEM (1,1) input
    # instead of the Python constant used here (default scale=False -> 1.0).
    def kernel(q_ref, k_ref, v_ref, wp_ref, bp_ref, t_ref, o_ref):
        q = q_ref[0]                                                # (nh, nq, hc)
        k = k_ref[0]                                                # (nh, np, hc)
        v = v_ref[0]                                                # (nh, np, hc)
        s = jnp.einsum('hqc,hkc->hqk', q, k,
                       preferred_element_type=jnp.float32) * inv    # (nh, nq, np)
        s = s - jnp.max(s, axis=-1, keepdims=True)
        p = jnp.exp(s)
        p = p / jnp.sum(p, axis=-1, keepdims=True)
        o = jnp.einsum('hqk,hkc->hqc', p, v,
                       preferred_element_type=jnp.float32)          # (nh, nq, hc)
        nq = q.shape[1]
        acc = jnp.zeros((nq, ct), jnp.float32)                      # lane-dense output
        for h in range(nh):   # per-head slab of the (ec, ct) projection weight
            acc = acc + jnp.dot(o[h], wp_ref[h], preferred_element_type=jnp.float32)
        y = acc + bp_ref[...]
        o_ref[0] = (y * scale_val + t_ref[0]).astype(o_ref.dtype)

    return kernel


def mha_proj_residual(q, k, v, wp3, bp, text, scale_val):
    """q: (bs,nh,nq,hc); k,v: (bs,nh,np,hc); wp3: (nh,hc,ct); text: (bs,nq,ct)."""
    bs, nh, nq, hc = q.shape
    npatch = k.shape[2]
    ct = wp3.shape[2]
    kernel = _make_attn_kernel(nh, hc, ct, scale_val)
    return pl.pallas_call(
        kernel,
        out_shape=jax.ShapeDtypeStruct((bs, nq, ct), jnp.float32),
        grid=(bs,),
        in_specs=[
            pl.BlockSpec((1, nh, nq, hc), lambda i: (i, 0, 0, 0)),
            pl.BlockSpec((1, nh, npatch, hc), lambda i: (i, 0, 0, 0)),
            pl.BlockSpec((1, nh, npatch, hc), lambda i: (i, 0, 0, 0)),
            pl.BlockSpec((nh, hc, ct), lambda i: (0, 0, 0)),
            pl.BlockSpec((1, ct), lambda i: (0, 0)),
            pl.BlockSpec((1, nq, ct), lambda i: (i, 0, 0)),
        ],
        out_specs=pl.BlockSpec((1, nq, ct), lambda i: (i, 0, 0)),
        compiler_params=pltpu.CompilerParams(
            dimension_semantics=("parallel",), vmem_limit_bytes=_VMEM_LIMIT),
    )(q.astype(jnp.float32), k.astype(jnp.float32), v.astype(jnp.float32),
      wp3.astype(jnp.float32), bp.reshape(1, ct).astype(jnp.float32),
      text.astype(jnp.float32))


# ---------------------------------------------------------------------------
# Full forward (Pallas) and pure-JAX reference
# ---------------------------------------------------------------------------
def image_pooling_attn_forward(x_list, text, params, nh, k, scale_val=1.0):
    bs, nq, ct = text.shape
    ec = params["k_lin"][0].shape[0]
    hc = ec // nh
    assert len(x_list) == len(params["proj"])

    # 1) per-level 1x1-conv projection + adaptive max pool, concat along patch axis
    feats = []
    for (w, b), xm in zip(params["proj"], x_list):
        xh = jnp.transpose(xm, (0, 2, 3, 1))       # NCHW -> NHWC (layout plumbing only)
        feats.append(proj_pool(xh, w, b, k))
    x = jnp.concatenate(feats, axis=1)             # (bs, np, ec)
    npatch = x.shape[1]

    # 2) fused LayerNorm + Linear for q / k / v
    q = ln_linear(text.reshape(bs * nq, ct), *params["q_ln"], *params["q_lin"])
    kk = ln_linear(x.reshape(bs * npatch, ec), *params["k_ln"], *params["k_lin"])
    vv = ln_linear(x.reshape(bs * npatch, ec), *params["v_ln"], *params["v_lin"])

    # 3) head-major layout for the attention kernel
    qh = jnp.transpose(q.reshape(bs, nq, nh, hc), (0, 2, 1, 3))
    kh = jnp.transpose(kk.reshape(bs, npatch, nh, hc), (0, 2, 1, 3))
    vh = jnp.transpose(vv.reshape(bs, npatch, nh, hc), (0, 2, 1, 3))

    wp, bp = params["proj_out"]
    wp3 = wp.reshape(nh, hc, ct)                   # per-head slabs of the (ec, ct) proj
    return mha_proj_residual(qh, kh, vh, wp3, bp, text, scale_val)


def _layer_norm(x, gamma, beta, eps=1e-5):
    mu = jnp.mean(x, axis=-1, keepdims=True)
    var = jnp.mean((x - mu) ** 2, axis=-1, keepdims=True)
    return (x - mu) / jnp.sqrt(var + eps) * gamma + beta


def image_pooling_attn_reference(x_list, text, params, nh, k, scale_val=1.0):
    bs, nq, ct = text.shape
    ec = params["k_lin"][0].shape[0]
    hc = ec // nh
    feats = []
    for (w, b), xm in zip(params["proj"], x_list):
        xh = jnp.transpose(xm, (0, 2, 3, 1))
        y = jnp.einsum('nhwc,ce->nhwe', xh, w) + b
        N, H, W, _ = y.shape
        assert H % k == 0 and W % k == 0           # simple pooling path for the test
        pooled = jnp.max(y.reshape(N, k, H // k, k, W // k, ec), axis=(2, 4))
        feats.append(pooled.reshape(N, k * k, ec))
    x = jnp.concatenate(feats, axis=1)

    q = _layer_norm(text, *params["q_ln"]) @ params["q_lin"][0] + params["q_lin"][1]
    kk = _layer_norm(x, *params["k_ln"]) @ params["k_lin"][0] + params["k_lin"][1]
    vv = _layer_norm(x, *params["v_ln"]) @ params["v_lin"][0] + params["v_lin"][1]

    q4 = q.reshape(bs, nq, nh, hc)
    k4 = kk.reshape(bs, -1, nh, hc)
    v4 = vv.reshape(bs, -1, nh, hc)
    aw = jnp.einsum('bnmc,bkmc->bmnk', q4, k4) / math.sqrt(hc)
    aw = jax.nn.softmax(aw, axis=-1)
    o = jnp.einsum('bmnk,bkmc->bnmc', aw, v4).reshape(bs, nq, ec)
    out = o @ params["proj_out"][0] + params["proj_out"][1]
    return out * scale_val + text


# ---------------------------------------------------------------------------
# Deterministic synthetic parameters
# ---------------------------------------------------------------------------
def init_params(key, ch, ec, ct):
    keys = jax.random.split(key, len(ch) + 7)
    it = iter(keys)

    def linear(kk, din, dout, s=0.1):
        kw, kb = jax.random.split(kk)
        return (s * jax.random.normal(kw, (din, dout), jnp.float32),
                s * jax.random.normal(kb, (dout,), jnp.float32))

    def layer_norm_params(kk, d):
        kg, kb = jax.random.split(kk)
        return (1.0 + 0.1 * jax.random.normal(kg, (d,), jnp.float32),
                0.1 * jax.random.normal(kb, (d,), jnp.float32))

    return {
        "proj": [linear(next(it), c, ec) for c in ch],     # 1x1 convs as (Cin, ec) mats
        "q_ln": layer_norm_params(next(it), ct), "q_lin": linear(next(it), ct, ec),
        "k_ln": layer_norm_params(next(it), ec), "k_lin": linear(next(it), ec, ec),
        "v_ln": layer_norm_params(next(it), ec), "v_lin": linear(next(it), ec, ec),
        "proj_out": linear(next(it), ec, ct),
    }


if __name__ == "__main__":
    key = jax.random.PRNGKey(0)
    kx0, kx1, kt, kp = jax.random.split(key, 4)

    bs, ec, ct, nh, kpool = 2, 32, 64, 4, 3     # hc = 8
    ch = (16, 32)                               # two feature levels
    spatial = ((12, 12), (6, 6))                # divisible by kpool
    nq = 8                                      # text tokens

    x_list = [jax.random.normal(kk, (bs, c, h, w), jnp.float32)
              for kk, c, (h, w) in zip((kx0, kx1), ch, spatial)]
    text = jax.random.normal(kt, (bs, nq, ct), jnp.float32)
    params = init_params(kp, ch, ec, ct)

    out = jax.block_until_ready(
        image_pooling_attn_forward(x_list, text, params, nh, kpool))
    ref = jax.block_until_ready(
        image_pooling_attn_reference(x_list, text, params, nh, kpool))

    assert out.shape == text.shape, out.shape
    np.testing.assert_allclose(np.asarray(out), np.asarray(ref), rtol=2e-3, atol=2e-3)
    print("KERNEL_OK")
</pallas_src>

<mosaic_0001>
module attributes {stable_mosaic.version = 11 : i64} {
  func.func @kernel(%arg0: i32, %arg1: memref<1x12x12x16xf32, #tpu.memory_space<vmem>>, %arg2: memref<16x32xf32, #tpu.memory_space<vmem>>, %arg3: memref<1x32xf32, #tpu.memory_space<vmem>>, %arg4: memref<1x9x32xf32, #tpu.memory_space<vmem>>) attributes {dimension_semantics = [#tpu.dimension_semantics<parallel>], iteration_bounds = array<i64: 2>, scalar_prefetch = 0 : i64, scratch_operands = 0 : i64, tpu.core_type = #tpu.core_type<tc>, window_params = [{transform_indices = @transform_0, window_bounds = array<i64: 1, 12, 12, 16>}, {pipeline_mode = #tpu.pipeline_mode<synchronous>, transform_indices = @transform_1, window_bounds = array<i64: 16, 32>}, {pipeline_mode = #tpu.pipeline_mode<synchronous>, transform_indices = @transform_2, window_bounds = array<i64: 1, 32>}, {transform_indices = @transform_3, window_bounds = array<i64: 1, 9, 32>}]} {
    %c0 = arith.constant 0 : index
    %c0_0 = arith.constant 0 : index
    %c0_1 = arith.constant 0 : index
    %c0_2 = arith.constant 0 : index
    %0 = vector.load %arg1[%c0, %c0_0, %c0_1, %c0_2] : memref<1x12x12x16xf32, #tpu.memory_space<vmem>>, vector<1x12x12x16xf32>
    %1 = vector.shape_cast %0 : vector<1x12x12x16xf32> to vector<12x12x16xf32>
    %2 = vector.shape_cast %1 : vector<12x12x16xf32> to vector<144x16xf32>
    %c0_3 = arith.constant 0 : index
    %c0_4 = arith.constant 0 : index
    %3 = vector.load %arg2[%c0_3, %c0_4] : memref<16x32xf32, #tpu.memory_space<vmem>>, vector<16x32xf32>
    %cst = arith.constant dense<0.000000e+00> : vector<144x32xf32>
    %4 = tpu.matmul %2, %3, %cst {dimension_numbers = #tpu.dot_dimension_numbers<[1], [0], [0], [1], [0, 0, 1, 1], [], []>} : vector<144x16xf32>, vector<16x32xf32>, vector<144x32xf32> -> vector<144x32xf32>
    %c0_5 = arith.constant 0 : index
    %c0_6 = arith.constant 0 : index
    %5 = vector.load %arg3[%c0_5, %c0_6] : memref<1x32xf32, #tpu.memory_space<vmem>>, vector<1x32xf32>
    %6 = vector.broadcast %5 : vector<1x32xf32> to vector<144x32xf32>
    %7 = arith.addf %4, %6 : vector<144x32xf32>
    %8 = vector.shape_cast %7 : vector<144x32xf32> to vector<12x12x32xf32>
    %9 = vector.extract_strided_slice %8 {offsets = [0, 0, 0], sizes = [4, 4, 32], strides = [1, 1, 1]} : vector<12x12x32xf32> to vector<4x4x32xf32>
    %cst_7 = arith.constant dense<0xFF800000> : vector<4x32xf32>
    %10 = vector.multi_reduction <maximumf>, %9, %cst_7 [0] : vector<4x4x32xf32> to vector<4x32xf32>
    %cst_8 = arith.constant dense<0xFF800000> : vector<32xf32>
    %11 = vector.multi_reduction <maximumf>, %10, %cst_8 [0] : vector<4x32xf32> to vector<32xf32>
    %12 = vector.shape_cast %11 : vector<32xf32> to vector<1x32xf32>
    %c0_9 = arith.constant 0 : index
    %c0_10 = arith.constant 0 : index
    %c0_11 = arith.constant 0 : index
    %13 = vector.load %arg4[%c0_9, %c0_10, %c0_11] : memref<1x9x32xf32, #tpu.memory_space<vmem>>, vector<1x1x32xf32>
    %14 = vector.shape_cast %13 : vector<1x1x32xf32> to vector<1x32xf32>
    %15 = vector.shape_cast %12 : vector<1x32xf32> to vector<1x1x32xf32>
    tpu.vector_store %arg4[%c0_9, %c0_10, %c0_11], %15 {strides = array<i32>} : memref<1x9x32xf32, #tpu.memory_space<vmem>>, vector<1x1x32xf32>,
    %16 = vector.extract_strided_slice %8 {offsets = [0, 4, 0], sizes = [4, 4, 32], strides = [1, 1, 1]} : vector<12x12x32xf32> to vector<4x4x32xf32>
    %cst_12 = arith.constant dense<0xFF800000> : vector<4x32xf32>
    %17 = vector.multi_reduction <maximumf>, %16, %cst_12 [0] : vector<4x4x32xf32> to vector<4x32xf32>
    %cst_13 = arith.constant dense<0xFF800000> : vector<32xf32>
    %18 = vector.multi_reduction <maximumf>, %17, %cst_13 [0] : vector<4x32xf32> to vector<32xf32>
    %19 = vector.shape_cast %18 : vector<32xf32> to vector<1x32xf32>
    %c0_14 = arith.constant 0 : index
    %c1 = arith.constant 1 : index
    %c0_15 = arith.constant 0 : index
    %20 = vector.load %arg4[%c0_14, %c1, %c0_15] : memref<1x9x32xf32, #tpu.memory_space<vmem>>, vector<1x1x32xf32>
    %21 = vector.shape_cast %20 : vector<1x1x32xf32> to vector<1x32xf32>
    %22 = vector.shape_cast %19 : vector<1x32xf32> to vector<1x1x32xf32>
    tpu.vector_store %arg4[%c0_14, %c1, %c0_15], %22 {strides = array<i32>} : memref<1x9x32xf32, #tpu.memory_space<vmem>>, vector<1x1x32xf32>,
    %23 = vector.extract_strided_slice %8 {offsets = [0, 8, 0], sizes = [4, 4, 32], strides = [1, 1, 1]} : vector<12x12x32xf32> to vector<4x4x32xf32>
    %cst_16 = arith.constant dense<0xFF800000> : vector<4x32xf32>
    %24 = vector.multi_reduction <maximumf>, %23, %cst_16 [0] : vector<4x4x32xf32> to vector<4x32xf32>
    %cst_17 = arith.constant dense<0xFF800000> : vector<32xf32>
    %25 = vector.multi_reduction <maximumf>, %24, %cst_17 [0] : vector<4x32xf32> to vector<32xf32>
    %26 = vector.shape_cast %25 : vector<32xf32> to vector<1x32xf32>
    %c0_18 = arith.constant 0 : index
    %c2 = arith.constant 2 : index
    %c0_19 = arith.constant 0 : index
    %27 = vector.load %arg4[%c0_18, %c2, %c0_19] : memref<1x9x32xf32, #tpu.memory_space<vmem>>, vector<1x1x32xf32>
    %28 = vector.shape_cast %27 : vector<1x1x32xf32> to vector<1x32xf32>
    %29 = vector.shape_cast %26 : vector<1x32xf32> to vector<1x1x32xf32>
    tpu.vector_store %arg4[%c0_18, %c2, %c0_19], %29 {strides = array<i32>} : memref<1x9x32xf32, #tpu.memory_space<vmem>>, vector<1x1x32xf32>,
    %30 = vector.extract_strided_slice %8 {offsets = [4, 0, 0], sizes = [4, 4, 32], strides = [1, 1, 1]} : vector<12x12x32xf32> to vector<4x4x32xf32>
    %cst_20 = arith.constant dense<0xFF800000> : vector<4x32xf32>
    %31 = vector.multi_reduction <maximumf>, %30, %cst_20 [0] : vector<4x4x32xf32> to vector<4x32xf32>
    %cst_21 = arith.constant dense<0xFF800000> : vector<32xf32>
    %32 = vector.multi_reduction <maximumf>, %31, %cst_21 [0] : vector<4x32xf32> to vector<32xf32>
    %33 = vector.shape_cast %32 : vector<32xf32> to vector<1x32xf32>
    %c0_22 = arith.constant 0 : index
    %c3 = arith.constant 3 : index
    %c0_23 = arith.constant 0 : index
    %34 = vector.load %arg4[%c0_22, %c3, %c0_23] : memref<1x9x32xf32, #tpu.memory_space<vmem>>, vector<1x1x32xf32>
    %35 = vector.shape_cast %34 : vector<1x1x32xf32> to vector<1x32xf32>
    %36 = vector.shape_cast %33 : vector<1x32xf32> to vector<1x1x32xf32>
    tpu.vector_store %arg4[%c0_22, %c3, %c0_23], %36 {strides = array<i32>} : memref<1x9x32xf32, #tpu.memory_space<vmem>>, vector<1x1x32xf32>,
    %37 = vector.extract_strided_slice %8 {offsets = [4, 4, 0], sizes = [4, 4, 32], strides = [1, 1, 1]} : vector<12x12x32xf32> to vector<4x4x32xf32>
    %cst_24 = arith.constant dense<0xFF800000> : vector<4x32xf32>
    %38 = vector.multi_reduction <maximumf>, %37, %cst_24 [0] : vector<4x4x32xf32> to vector<4x32xf32>
    %cst_25 = arith.constant dense<0xFF800000> : vector<32xf32>
    %39 = vector.multi_reduction <maximumf>, %38, %cst_25 [0] : vector<4x32xf32> to vector<32xf32>
    %40 = vector.shape_cast %39 : vector<32xf32> to vector<1x32xf32>
    %c0_26 = arith.constant 0 : index
    %c4 = arith.constant 4 : index
    %c0_27 = arith.constant 0 : index
    %41 = vector.load %arg4[%c0_26, %c4, %c0_27] : memref<1x9x32xf32, #tpu.memory_space<vmem>>, vector<1x1x32xf32>
    %42 = vector.shape_cast %41 : vector<1x1x32xf32> to vector<1x32xf32>
    %43 = vector.shape_cast %40 : vector<1x32xf32> to vector<1x1x32xf32>
    tpu.vector_store %arg4[%c0_26, %c4, %c0_27], %43 {strides = array<i32>} : memref<1x9x32xf32, #tpu.memory_space<vmem>>, vector<1x1x32xf32>,
    %44 = vector.extract_strided_slice %8 {offsets = [4, 8, 0], sizes = [4, 4, 32], strides = [1, 1, 1]} : vector<12x12x32xf32> to vector<4x4x32xf32>
    %cst_28 = arith.constant dense<0xFF800000> : vector<4x32xf32>
    %45 = vector.multi_reduction <maximumf>, %44, %cst_28 [0] : vector<4x4x32xf32> to vector<4x32xf32>
    %cst_29 = arith.constant dense<0xFF800000> : vector<32xf32>
    %46 = vector.multi_reduction <maximumf>, %45, %cst_29 [0] : vector<4x32xf32> to vector<32xf32>
    %47 = vector.shape_cast %46 : vector<32xf32> to vector<1x32xf32>
    %c0_30 = arith.constant 0 : index
    %c5 = arith.constant 5 : index
    %c0_31 = arith.constant 0 : index
    %48 = vector.load %arg4[%c0_30, %c5, %c0_31] : memref<1x9x32xf32, #tpu.memory_space<vmem>>, vector<1x1x32xf32>
    %49 = vector.shape_cast %48 : vector<1x1x32xf32> to vector<1x32xf32>
    %50 = vector.shape_cast %47 : vector<1x32xf32> to vector<1x1x32xf32>
    tpu.vector_store %arg4[%c0_30, %c5, %c0_31], %50 {strides = array<i32>} : memref<1x9x32xf32, #tpu.memory_space<vmem>>, vector<1x1x32xf32>,
    %51 = vector.extract_strided_slice %8 {offsets = [8, 0, 0], sizes = [4, 4, 32], strides = [1, 1, 1]} : vector<12x12x32xf32> to vector<4x4x32xf32>
    %cst_32 = arith.constant dense<0xFF800000> : vector<4x32xf32>
    %52 = vector.multi_reduction <maximumf>, %51, %cst_32 [0] : vector<4x4x32xf32> to vector<4x32xf32>
    %cst_33 = arith.constant dense<0xFF800000> : vector<32xf32>
    %53 = vector.multi_reduction <maximumf>, %52, %cst_33 [0] : vector<4x32xf32> to vector<32xf32>
    %54 = vector.shape_cast %53 : vector<32xf32> to vector<1x32xf32>
    %c0_34 = arith.constant 0 : index
    %c6 = arith.constant 6 : index
    %c0_35 = arith.constant 0 : index
    %55 = vector.load %arg4[%c0_34, %c6, %c0_35] : memref<1x9x32xf32, #tpu.memory_space<vmem>>, vector<1x1x32xf32>
    %56 = vector.shape_cast %55 : vector<1x1x32xf32> to vector<1x32xf32>
    %57 = vector.shape_cast %54 : vector<1x32xf32> to vector<1x1x32xf32>
    tpu.vector_store %arg4[%c0_34, %c6, %c0_35], %57 {strides = array<i32>} : memref<1x9x32xf32, #tpu.memory_space<vmem>>, vector<1x1x32xf32>,
    %58 = vector.extract_strided_slice %8 {offsets = [8, 4, 0], sizes = [4, 4, 32], strides = [1, 1, 1]} : vector<12x12x32xf32> to vector<4x4x32xf32>
    %cst_36 = arith.constant dense<0xFF800000> : vector<4x32xf32>
    %59 = vector.multi_reduction <maximumf>, %58, %cst_36 [0] : vector<4x4x32xf32> to vector<4x32xf32>
    %cst_37 = arith.constant dense<0xFF800000> : vector<32xf32>
    %60 = vector.multi_reduction <maximumf>, %59, %cst_37 [0] : vector<4x32xf32> to vector<32xf32>
    %61 = vector.shape_cast %60 : vector<32xf32> to vector<1x32xf32>
    %c0_38 = arith.constant 0 : index
    %c7 = arith.constant 7 : index
    %c0_39 = arith.constant 0 : index
    %62 = vector.load %arg4[%c0_38, %c7, %c0_39] : memref<1x9x32xf32, #tpu.memory_space<vmem>>, vector<1x1x32xf32>
    %63 = vector.shape_cast %62 : vector<1x1x32xf32> to vector<1x32xf32>
    %64 = vector.shape_cast %61 : vector<1x32xf32> to vector<1x1x32xf32>
    tpu.vector_store %arg4[%c0_38, %c7, %c0_39], %64 {strides = array<i32>} : memref<1x9x32xf32, #tpu.memory_space<vmem>>, vector<1x1x32xf32>,
    %65 = vector.extract_strided_slice %8 {offsets = [8, 8, 0], sizes = [4, 4, 32], strides = [1, 1, 1]} : vector<12x12x32xf32> to vector<4x4x32xf32>
    %cst_40 = arith.constant dense<0xFF800000> : vector<4x32xf32>
    %66 = vector.multi_reduction <maximumf>, %65, %cst_40 [0] : vector<4x4x32xf32> to vector<4x32xf32>
    %cst_41 = arith.constant dense<0xFF800000> : vector<32xf32>
    %67 = vector.multi_reduction <maximumf>, %66, %cst_41 [0] : vector<4x32xf32> to vector<32xf32>
    %68 = vector.shape_cast %67 : vector<32xf32> to vector<1x32xf32>
    %c0_42 = arith.constant 0 : index
    %c8 = arith.constant 8 : index
    %c0_43 = arith.constant 0 : index
    %69 = vector.load %arg4[%c0_42, %c8, %c0_43] : memref<1x9x32xf32, #tpu.memory_space<vmem>>, vector<1x1x32xf32>
    %70 = vector.shape_cast %69 : vector<1x1x32xf32> to vector<1x32xf32>
    %71 = vector.shape_cast %68 : vector<1x32xf32> to vector<1x1x32xf32>
    tpu.vector_store %arg4[%c0_42, %c8, %c0_43], %71 {strides = array<i32>} : memref<1x9x32xf32, #tpu.memory_space<vmem>>, vector<1x1x32xf32>,
    return
  }
  func.func @transform_0(%arg0: i32) -> (i32, i32, i32, i32) {
    %c0_i32 = arith.constant 0 : i32
    %c0_i32_0 = arith.constant 0 : i32
    %c0_i32_1 = arith.constant 0 : i32
    %c0_i32_2 = arith.constant 0 : i32
    return %arg0, %c0_i32, %c0_i32_0, %c0_i32_1 : i32, i32, i32, i32
  }
  func.func @transform_1(%arg0: i32) -> (i32, i32) {
    %c0_i32 = arith.constant 0 : i32
    %c0_i32_0 = arith.constant 0 : i32
    %c0_i32_1 = arith.constant 0 : i32
    return %c0_i32, %c0_i32_0 : i32, i32
  }
  func.func @transform_2(%arg0: i32) -> (i32, i32) {
    %c0_i32 = arith.constant 0 : i32
    %c0_i32_0 = arith.constant 0 : i32
    %c0_i32_1 = arith.constant 0 : i32
    return %c0_i32, %c0_i32_0 : i32, i32
  }
  func.func @transform_3(%arg0: i32) -> (i32, i32, i32) {
    %c0_i32 = arith.constant 0 : i32
    %c0_i32_0 = arith.constant 0 : i32
    %c0_i32_1 = arith.constant 0 : i32
    return %arg0, %c0_i32, %c0_i32_0 : i32, i32, i32
  }
}

</mosaic_0001>

<llo_original>
// kernel: tpu_custom_call.1
$region0: #{tpu_custom_call.1}
  #allocation0 [shape = 'u32[]', space=smem, size = 0x4, offset = 0x4, fixed_abs, tag = 'smem constant byte address 0x4 - core index']
  #allocation1 [shape = 'u32[144,128]{1,0:T(1,128)}', space=vmem, size = 0x12000, scoped, tag = 'internal scratch']
  %s0 = inlined_call_operand.vmem [shape: f32[2,12,12,16], index: 0, kind: input, shape index: {}]
  %s1 = inlined_call_operand.vmem [shape: f32[16,32], index: 1, kind: input, shape index: {}]
  %s2 = inlined_call_operand.vmem [shape: f32[1,32], index: 2, kind: input, shape index: {}]
  %s3 = inlined_call_operand.vmem [shape: f32[2,9,32], index: 3, kind: output, shape index: {}]
  %s4 = sld [smem:[#allocation0]]
  $region45: #{tpu_custom_call.1} parent=0
    _
  %s6 = ssub.s32 1, %s4
  %s7 = scalar_select 0, %s6, %s4
  loop: start=0, step=1, limit=4
  $region2: #{tpu_custom_call.1} parent=0 // loop_pre_header
    _
  $region3: #{tpu_custom_call.1} parent=0 // loop_header
    %s9 = sphi 0, %s13
    %p10 = scmp.ge.s32.totalorder %s9, 4
    %s19 = sphi 0, %s21
    %s22 = sphi 0, %s19
    %s23 = sphi 0, %s22
    %s39 = sphi 0, %s23
    %s43 = sphi 0, %s43
    %s45 = sphi 0, %s43
    %s46 = sphi 0, %s45
    %s60 = sphi 0, %s46
    %s64 = sphi 0, %s64
    %s66 = sphi 0, %s64
    %s67 = sphi 0, %s66
    %s81 = sphi 0, %s67
    %s87 = sphi 0, %s89
    %s90 = sphi 0, %s87
    %s91 = sphi 0, %s90
    %s107 = sphi 0, %s91
  $region4: #{tpu_custom_call.1} parent=0 // loop_header_branch
    %12 = sbr.rel (%p10) target = $region8
  $region5: #{tpu_custom_call.1} parent=0 // loop_body
    %s14 = ssub.s32 %s9, 1
    %s15 = ssub.s32 %s9, 2
    %s16 = sadd.s32 %s9, 1
    %s17 = ssub.s32 %s9, %s16
    %p18 = scmp.eq.s32.totalorder %s17, 0
    %s20 = sadd.s32 %s19, 1
    %s21 = scalar_select %p18, %s19, %s20
    %p24 = pneg %p18
    %p25 = scmp.eq.s32.totalorder %s9, 1
    %p26 = por %p24, %p25
    %p27 = scmp.ne.s32.totalorder %s19, %s22
    %p28 = scmp.eq.s32.totalorder %s9, 0
    %p29 = por %p27, %p28
    %p30 = scmp.ne.s32.totalorder %s19, %s22
    %p31 = scmp.eq.s32.totalorder %s14, 1
    %p32 = por %p30, %p31
    %p33 = scmp.ne.s32.totalorder %s22, %s23
    %p34 = scmp.eq.s32.totalorder %s14, 0
    %p35 = por %p33, %p34
    %p36 = scmp.ne.s32.totalorder %s22, %s23
    %p37 = scmp.eq.s32.totalorder %s15, 1
    %p38 = por %p36, %p37
    %p40 = scmp.ne.s32.totalorder %s23, %s39
    %p41 = scmp.eq.s32.totalorder %s15, 0
    %p42 = por %p40, %p41
    %s44 = sadd.s32 %s43, 1
    %p47 = scmp.eq.s32.totalorder %s9, 1
    %p48 = scmp.ne.s32.totalorder %s43, %s45
    %p49 = scmp.eq.s32.totalorder %s9, 0
    %p50 = por %p48, %p49
    %p51 = scmp.ne.s32.totalorder %s43, %s45
    %p52 = scmp.eq.s32.totalorder %s14, 1
    %p53 = por %p51, %p52
    %p54 = scmp.ne.s32.totalorder %s45, %s46
    %p55 = scmp.eq.s32.totalorder %s14, 0
    %p56 = por %p54, %p55
    %p57 = scmp.ne.s32.totalorder %s45, %s46
    %p58 = scmp.eq.s32.totalorder %s15, 1
    %p59 = por %p57, %p58
    %p61 = scmp.ne.s32.totalorder %s46, %s60
    %p62 = scmp.eq.s32.totalorder %s15, 0
    %p63 = por %p61, %p62
    %s65 = sadd.s32 %s64, 1
    %p68 = scmp.eq.s32.totalorder %s9, 1
    %p69 = scmp.ne.s32.totalorder %s64, %s66
    %p70 = scmp.eq.s32.totalorder %s9, 0
    %p71 = por %p69, %p70
    %p72 = scmp.ne.s32.totalorder %s64, %s66
    %p73 = scmp.eq.s32.totalorder %s14, 1
    %p74 = por %p72, %p73
    %p75 = scmp.ne.s32.totalorder %s66, %s67
    %p76 = scmp.eq.s32.totalorder %s14, 0
    %p77 = por %p75, %p76
    %p78 = scmp.ne.s32.totalorder %s66, %s67
    %p79 = scmp.eq.s32.totalorder %s15, 1
    %p80 = por %p78, %p79
    %p82 = scmp.ne.s32.totalorder %s67, %s81
    %p83 = scmp.eq.s32.totalorder %s15, 0
    %p84 = por %p82, %p83
    %s85 = ssub.s32 %s9, %s16
    %p86 = scmp.eq.s32.totalorder %s85, 0
    %s88 = sadd.s32 %s87, 1
    %s89 = scalar_select %p86, %s87, %s88
    %p92 = pneg %p86
    %p93 = scmp.eq.s32.totalorder %s9, 1
    %p94 = por %p92, %p93
    %p95 = scmp.ne.s32.totalorder %s87, %s90
    %p96 = scmp.eq.s32.totalorder %s9, 0
    %p97 = por %p95, %p96
    %p98 = scmp.ne.s32.totalorder %s87, %s90
    %p99 = scmp.eq.s32.totalorder %s14, 1
    %p100 = por %p98, %p99
    %p101 = scmp.ne.s32.totalorder %s90, %s91
    %p102 = scmp.eq.s32.totalorder %s14, 0
    %p103 = por %p101, %p102
    %p104 = scmp.ne.s32.totalorder %s90, %s91
    %p105 = scmp.eq.s32.totalorder %s15, 1
    %p106 = por %p104, %p105
    %p108 = scmp.ne.s32.totalorder %s91, %s107
    %p109 = scmp.eq.s32.totalorder %s15, 0
    %p110 = por %p108, %p109
    %p111 = scmp.le.s32.totalorder 1, %s9
    %p112 = scmp.lt.s32.totalorder %s9, 3
    %p113 = pnand %p111, %p112
    %p114 = pneg %p113
    // Predicated region
    $region9: #{tpu_custom_call.1} parent=5 // pred_check
      _
    $region10: #{tpu_custom_call.1} parent=5 // pred_check_branch
      %116 = sbr.rel (%p113) target = $region12
    $region11: #{tpu_custom_call.1} parent=5 // pred_region
      %s117 = ssub.s32 %s9, 1
      // Predicated region
      $region13: #{tpu_custom_call.1} parent=11 // pred_check
        %p118 = pneg %p56
      $region14: #{tpu_custom_call.1} parent=11 // pred_check_branch
        %120 = sbr.rel (%p118) target = $region16
      $region15: #{tpu_custom_call.1} parent=11 // pred_region
        _
      $region16: #{tpu_custom_call.1} parent=11 // pred_fallthru
        _
      // Predicated region
      $region17: #{tpu_custom_call.1} parent=11 // pred_check
        %p121 = pneg %p77
      $region18: #{tpu_custom_call.1} parent=11 // pred_check_branch
        %123 = sbr.rel (%p121) target = $region20
      $region19: #{tpu_custom_call.1} parent=11 // pred_region
        _
      $region20: #{tpu_custom_call.1} parent=11 // pred_fallthru
        _
    $region12: #{tpu_custom_call.1} parent=5 // pred_fallthru
      _
    %p124 = scmp.lt.s32.totalorder %s9, 2
    // Predicated region
    $region21: #{tpu_custom_call.1} parent=5 // pred_check
      %p125 = pneg %p124
    $region22: #{tpu_custom_call.1} parent=5 // pred_check_branch
      %127 = sbr.rel (%p125) target = $region24
    $region23: #{tpu_custom_call.1} parent=5 // pred_region
      // Predicated region
      $region25: #{tpu_custom_call.1} parent=23 // pred_check
        %p128 = pneg %p29
      $region26: #{tpu_custom_call.1} parent=23 // pred_check_branch
        %130 = sbr.rel (%p128) target = $region28
      $region27: #{tpu_custom_call.1} parent=23 // pred_region
        %p131 = scmp.lt.s32.totalorder %s9, 1
        %s132 = scalar_select %p131, %s9, 1
        %s133 = smul.addr %s132, 24
        %s134 = smul.addr %s133, 8
        %s135 = scalar_lea.vmem %s0, %s134
      $region28: #{tpu_custom_call.1} parent=23 // pred_fallthru
        _
    $region24: #{tpu_custom_call.1} parent=5 // pred_fallthru
      _
    %p136 = scmp.le.s32.totalorder 1, %s9
    %p137 = scmp.lt.s32.totalorder %s9, 3
    %p138 = pnand %p136, %p137
    %p139 = pneg %p138
    // Predicated region
    $region29: #{tpu_custom_call.1} parent=5 // pred_check
      _
    $region30: #{tpu_custom_call.1} parent=5 // pred_check_branch
      %141 = sbr.rel (%p138) target = $region32
    $region31: #{tpu_custom_call.1} parent=5 // pred_region
      %s142 = ssub.s32 %s9, 1
      %p143 = scmp.lt.s32.totalorder %s14, 1
      %s144 = scalar_select %p143, %s14, 1
      %s145 = smul.addr %s144, 24
      %s146 = smul.addr %s145, 8
      %s147 = scalar_lea.vmem %s0, %s146
      %p148 = pneg %p35
      %p149 = pneg %p32
      %p150 = pneg %p56
      %p151 = pneg %p53
      %p152 = pneg %p77
      %p153 = pneg %p74
      %p154 = pneg %p103
      %p155 = pneg %p100
      %p156 = scmp.lt.s32.totalorder %s14, 1
      %s157 = scalar_select %p156, %s14, 1
      %s158 = smul.addr %s157, 2
      %s159 = smul.addr %s158, 8
      %s160 = scalar_lea.vmem %s3, %s159
      %p161 = scmp.lt.s32.totalorder %s14, 1
      %s162 = scalar_select %p161, %s14, 1
      %s163 = smul.addr %s162, 24
      %s164 = smul.addr %s163, 8
      %s165 = scalar_lea.vmem %s0, %s164
      %p166 = scmp.lt.s32.totalorder %s14, 1
      %s167 = scalar_select %p166, %s14, 1
      %s168 = smul.addr %s167, 2
      %s169 = smul.addr %s168, 8
      %s170 = scalar_lea.vmem %s3, %s169
      %v171 = vld [vmem:[%s165] sm:$0xff]
      %v172 = vld [vmem:[%s165 + $0x8] sm:$0xf]
      %v173 = vld [vmem:[%s165 + $0x10] sm:$0xff]
      %v174 = vld [vmem:[%s165 + $0x18] sm:$0xf]
      %v175 = vld [vmem:[%s165 + $0x20] sm:$0xff]
      %v176 = vld [vmem:[%s165 + $0x28] sm:$0xf]
      %v177 = vld [vmem:[%s165 + $0x30] sm:$0xff]
      %v178 = vld [vmem:[%s165 + $0x38] sm:$0xf]
      %v179 = vld [vmem:[%s165 + $0x40] sm:$0xff]
      %v180 = vld [vmem:[%s165 + $0x48] sm:$0xf]
      %v181 = vld [vmem:[%s165 + $0x50] sm:$0xff]
      %v182 = vld [vmem:[%s165 + $0x58] sm:$0xf]
      %v183 = vld [vmem:[%s165 + $0x60] sm:$0xff]
      %v184 = vld [vmem:[%s165 + $0x68] sm:$0xf]
      %v185 = vld [vmem:[%s165 + $0x70] sm:$0xff]
      %v186 = vld [vmem:[%s165 + $0x78] sm:$0xf]
      %v187 = vld [vmem:[%s165 + $0x80] sm:$0xff]
      %v188 = vld [vmem:[%s165 + $0x88] sm:$0xf]
      %v189 = vld [vmem:[%s165 + $0x90] sm:$0xff]
      %v190 = vld [vmem:[%s165 + $0x98] sm:$0xf]
      %v191 = vld [vmem:[%s165 + $0xa0] sm:$0xff]
      %v192 = vld [vmem:[%s165 + $0xa8] sm:$0xf]
      %v193 = vld [vmem:[%s165 + $0xb0] sm:$0xff]
      %v194 = vld [vmem:[%s165 + $0xb8] sm:$0xf]
      %v219 = vcombine.high %v171, %v171
      %v220 = vcombine.high %v173, %v173
      %v221 = vcombine.high %v175, %v175
      %v222 = vcombine.high %v177, %v177
      %v223 = vcombine.high %v179, %v179
      %v224 = vcombine.high %v181, %v181
      %v225 = vcombine.high %v183, %v183
      %v226 = vcombine.high %v185, %v185
      %v227 = vcombine.high %v187, %v187
      %v228 = vcombine.high %v189, %v189
      %v229 = vcombine.high %v191, %v191
      %v230 = vcombine.high %v193, %v193
      %v231 = vld [vmem:[%s1] sm:$0xff]
      %v232 = vld [vmem:[%s1 + $0x8] sm:$0xff]
      %v233 = vld [vmem:[%s2] sm:$0x1]
      %v235 = vlaneseq
      %v236 = vshrl.u32 %v235, 7
      %v237 = vsub.s32 0, %v236
      %v238 = vrot.slane %v233, %v237
      %v240 = vcombine.low %v171, %v219
      %v241 = vcombine.low %v172, %v173
      %v242 = vcombine.low %v220, %v174
      %v243 = vcombine.low %v175, %v221
      %v244 = vcombine.low %v176, %v177
      %v245 = vcombine.low %v222, %v178
      %v246 = vcombine.low %v179, %v223
      %v247 = vcombine.low %v180, %v181
      %v248 = vcombine.low %v224, %v182
      %v249 = vcombine.low %v183, %v225
      %v250 = vcombine.low %v184, %v185
      %v251 = vcombine.low %v226, %v186
      %v252 = vcombine.low %v187, %v227
      %v253 = vcombine.low %v188, %v189
      %v254 = vcombine.low %v228, %v190
      %v255 = vcombine.low %v191, %v229
      %v256 = vcombine.low %v192, %v193
      %v257 = vcombine.low %v230, %v194
      %vm258 = vcmask 130048
      %v259 = vsel %vm258, %v240, 0
      %v261 = vsel %vm258, %v241, 0
      %v263 = vsel %vm258, %v242, 0
      %v265 = vsel %vm258, %v243, 0
      %v267 = vsel %vm258, %v244, 0
      %v269 = vsel %vm258, %v245, 0
      %v271 = vsel %vm258, %v246, 0
      %v273 = vsel %vm258, %v247, 0
      %v275 = vsel %vm258, %v248, 0
      %v277 = vsel %vm258, %v249, 0
      %v279 = vsel %vm258, %v250, 0
      %v281 = vsel %vm258, %v251, 0
      %v283 = vsel %vm258, %v252, 0
      %v285 = vsel %vm258, %v253, 0
      %v287 = vsel %vm258, %v254, 0
      %v289 = vsel %vm258, %v255, 0
      %v291 = vsel %vm258, %v256, 0
      %v293 = vsel %vm258, %v257, 0
      %295 = vmatprep.subr.mxu0 0.0
      %296 = vmatpush1.msra.mxu0 %v231
      %297 = vmatprep.subr.mxu0 0.0
      %298 = vmatpush1.msra.mxu0 %v232
      %299 = vmatprep.subr.mxu0 0.0
      %300 = vmatpush1.msra.mxu0 0.0
      %301 = vmatprep.subr.mxu0 0.0
      %302 = vmatpush1.msra.mxu0 0.0
      %303 = vmatprep.subr.mxu0 0.0
      %304 = vmatpush1.msra.mxu0 0.0
      %305 = vmatprep.subr.mxu0 0.0
      %306 = vmatpush1.msra.mxu0 0.0
      %307 = vmatprep.subr.mxu0 0.0
      %308 = vmatpush1.msra.mxu0 0.0
      %309 = vmatprep.subr.mxu0 0.0
      %310 = vmatpush1.msra.mxu0 0.0
      %311 = vmatprep.subr.mxu0 0.0
      %312 = vmatpush1.msra.mxu0 0.0
      %313 = vmatprep.subr.mxu0 0.0
      %314 = vmatpush1.msra.mxu0 0.0
      %315 = vmatprep.subr.mxu0 0.0
      %316 = vmatpush1.msra.mxu0 0.0
      %317 = vmatprep.subr.mxu0 0.0
      %318 = vmatpush1.msra.mxu0 0.0
      %319 = vmatprep.subr.mxu0 0.0
      %320 = vmatpush1.msra.mxu0 0.0
      %321 = vmatprep.subr.mxu0 0.0
      %322 = vmatpush1.msra.mxu0 0.0
      %323 = vmatprep.subr.mxu0 0.0
      %324 = vmatpush1.msra.mxu0 0.0
      %325 = vmatprep.subr.mxu0 0.0
      %326 = vmatpush1.msra.mxu0 0.0
      %327 = vmatprep.subr.mxu0 0.0
      %328 = vmatpush1.msra.mxu0 0.0
      %329 = vmatprep.subr.mxu0 0.0
      %330 = vmatpush1.msra.mxu0 0.0
      %331 = vmatprep.subr.mxu0 0.0
      %332 = vmatpush1.msra.mxu0 0.0
      %333 = vmatprep.subr.mxu0 0.0
      %334 = vmatpush1.msra.mxu0 0.0
      %335 = vmatprep.subr.mxu0 0.0
      %336 = vmatpush1.msra.mxu0 0.0
      %337 = vmatprep.subr.mxu0 0.0
      %338 = vmatpush1.msra.mxu0 0.0
      %339 = vmatprep.subr.mxu0 0.0
      %340 = vmatpush1.msra.mxu0 0.0
      %341 = vmatprep.subr.mxu0 0.0
      %342 = vmatpush1.msra.mxu0 0.0
      %343 = vmatprep.subr.mxu0 0.0
      %344 = vmatpush1.msra.mxu0 0.0
      %345 = vmatprep.subr.mxu0 0.0
      %346 = vmatpush1.msra.mxu0 0.0
      %347 = vmatprep.subr.mxu0 0.0
      %348 = vmatpush1.msra.mxu0 0.0
      %349 = vmatprep.subr.mxu0 0.0
      %350 = vmatpush1.msra.mxu0 0.0
      %351 = vmatprep.subr.mxu0 0.0
      %352 = vmatpush1.msra.mxu0 0.0
      %353 = vmatprep.subr.mxu0 0.0
      %354 = vmatpush1.msra.mxu0 0.0
      %355 = vmatprep.subr.mxu0 0.0
      %356 = vmatpush1.msra.mxu0 0.0
      %357 = vmatprep.subr.mxu0 0.0
      %358 = vmatpush1.msra.mxu0 0.0
      %359 = vmatprep.mubr.f32.mxu0 0.0
      %360 = vmatmul.mubr.f32.gmra.mrb[0].mxu0 %v259
      %v361 = vpop.f32.mrb[0].mxu0
      %v362 = vadd.f32 %v238, %v361
      %v363 = vpop.f32.mrb[0].mxu0
      %364 = vmatprep.mubr.f32.mxu0 0.0
      %365 = vmatmul.mubr.f32.gmra.mrb[0].mxu0 %v261
      %v366 = vpop.f32.mrb[0].mxu0
      %v367 = vadd.f32 %v238, %v366
      %v368 = vpop.f32.mrb[0].mxu0
      %369 = vmatprep.mubr.f32.mxu0 0.0
      %370 = vmatmul.mubr.f32.gmra.mrb[0].mxu0 %v263
      %v371 = vpop.f32.mrb[0].mxu0
      %v372 = vadd.f32 %v238, %v371
      %v373 = vpop.f32.mrb[0].mxu0
      %374 = vmatprep.mubr.f32.mxu0 0.0
      %375 = vmatmul.mubr.f32.gmra.mrb[0].mxu0 %v265
      %v376 = vpop.f32.mrb[0].mxu0
      %v377 = vadd.f32 %v238, %v376
      %v378 = vpop.f32.mrb[0].mxu0
      %379 = vmatprep.mubr.f32.mxu0 0.0
      %380 = vmatmul.mubr.f32.gmra.mrb[0].mxu0 %v267
      %v381 = vpop.f32.mrb[0].mxu0
      %v382 = vadd.f32 %v238, %v381
      %v383 = vpop.f32.mrb[0].mxu0
      %384 = vmatprep.mubr.f32.mxu0 0.0
      %385 = vmatmul.mubr.f32.gmra.mrb[0].mxu0 %v269
      %v386 = vpop.f32.mrb[0].mxu0
      %v387 = vadd.f32 %v238, %v386
      %v388 = vpop.f32.mrb[0].mxu0
      %389 = vmatprep.mubr.f32.mxu0 0.0
      %390 = vmatmul.mubr.f32.gmra.mrb[0].mxu0 %v271
      %v391 = vpop.f32.mrb[0].mxu0
      %v392 = vadd.f32 %v238, %v391
      %v393 = vpop.f32.mrb[0].mxu0
      %394 = vmatprep.mubr.f32.mxu0 0.0
      %395 = vmatmul.mubr.f32.gmra.mrb[0].mxu0 %v273
      %v396 = vpop.f32.mrb[0].mxu0
      %v397 = vadd.f32 %v238, %v396
      %v398 = vpop.f32.mrb[0].mxu0
      %399 = vmatprep.mubr.f32.mxu0 0.0
      %400 = vmatmul.mubr.f32.gmra.mrb[0].mxu0 %v275
      %v401 = vpop.f32.mrb[0].mxu0
      %v402 = vadd.f32 %v238, %v401
      %v403 = vpop.f32.mrb[0].mxu0
      %404 = vmatprep.mubr.f32.mxu0 0.0
      %405 = vmatmul.mubr.f32.gmra.mrb[0].mxu0 %v277
      %v406 = vpop.f32.mrb[0].mxu0
      %v407 = vadd.f32 %v238, %v406
      %v408 = vpop.f32.mrb[0].mxu0
      %409 = vmatprep.mubr.f32.mxu0 0.0
      %410 = vmatmul.mubr.f32.gmra.mrb[0].mxu0 %v279
      %v411 = vpop.f32.mrb[0].mxu0
      %v412 = vadd.f32 %v238, %v411
      %v413 = vpop.f32.mrb[0].mxu0
      %414 = vmatprep.mubr.f32.mxu0 0.0
      %415 = vmatmul.mubr.f32.gmra.mrb[0].mxu0 %v281
      %v416 = vpop.f32.mrb[0].mxu0
      %v417 = vadd.f32 %v238, %v416
      %v418 = vpop.f32.mrb[0].mxu0
      %419 = vmatprep.mubr.f32.mxu0 0.0
      %420 = vmatmul.mubr.f32.gmra.mrb[0].mxu0 %v283
      %v421 = vpop.f32.mrb[0].mxu0
      %v422 = vadd.f32 %v238, %v421
      %v423 = vpop.f32.mrb[0].mxu0
      %424 = vmatprep.mubr.f32.mxu0 0.0
      %425 = vmatmul.mubr.f32.gmra.mrb[0].mxu0 %v285
      %v426 = vpop.f32.mrb[0].mxu0
      %v427 = vadd.f32 %v238, %v426
      %v428 = vpop.f32.mrb[0].mxu0
      %429 = vmatprep.mubr.f32.mxu0 0.0
      %430 = vmatmul.mubr.f32.gmra.mrb[0].mxu0 %v287
      %v431 = vpop.f32.mrb[0].mxu0
      %v432 = vadd.f32 %v238, %v431
      %v433 = vpop.f32.mrb[0].mxu0
      %434 = vmatprep.mubr.f32.mxu0 0.0
      %435 = vmatmul.mubr.f32.gmra.mrb[0].mxu0 %v289
      %v436 = vpop.f32.mrb[0].mxu0
      %v437 = vadd.f32 %v238, %v436
      %v438 = vpop.f32.mrb[0].mxu0
      %439 = vmatprep.mubr.f32.mxu0 0.0
      %440 = vmatmul.mubr.f32.gmra.mrb[0].mxu0 %v291
      %v441 = vpop.f32.mrb[0].mxu0
      %v442 = vadd.f32 %v238, %v441
      %v443 = vpop.f32.mrb[0].mxu0
      %444 = vmatprep.mubr.f32.mxu0 0.0
      %445 = vmatmul.mubr.f32.gmra.mrb[0].mxu0 %v293
      %v446 = vpop.f32.mrb[0].mxu0
      %v447 = vadd.f32 %v238, %v446
      %v448 = vpop.f32.mrb[0].mxu0
      %449 = vdwg.mxu0
      %v468 = vcombine.high %v362, %v362
      %v469 = vcombine.high %v367, %v367
      %v470 = vcombine.high %v372, %v372
      %v471 = vcombine.high %v377, %v377
      %v472 = vcombine.high %v382, %v382
      %v473 = vcombine.high %v387, %v387
      %v474 = vcombine.high %v392, %v392
      %v475 = vcombine.high %v397, %v397
      %v476 = vcombine.high %v402, %v402
      %v477 = vcombine.high %v407, %v407
      %v478 = vcombine.high %v412, %v412
      %v479 = vcombine.high %v417, %v417
      %v480 = vcombine.high %v422, %v422
      %v481 = vcombine.high %v427, %v427
      %v482 = vcombine.high %v432, %v432
      %v483 = vcombine.high %v437, %v437
      %v484 = vcombine.high %v442, %v442
      %v485 = vcombine.high %v447, %v447
      %vm504 = vcmask 257024
      %v505 = vsel %vm504, %v362, -inf
      %v506 = vsel %vm504, %v469, -inf
      %v507 = vsel %vm504, %v377, -inf
      %v508 = vsel %vm504, %v472, -inf
      %v509 = vmax.f32 %v505, %v506
      %v510 = vmax.f32 %v507, %v508
      %v511 = vmax.f32 %v509, %v510
      %v512 = vsel %vm504, %v511, -inf
      %v513 = vrot.slane %v512, 4
      %v514 = vmax.f32 %v512, %v513
      %v515 = vrot.slane %v514, 2
      %v516 = vmax.f32 %v514, %v515
      %v517 = vrot.slane %v516, 1
      %v518 = vmax.f32 %v516, %v517
      %vm519 = vcmask 253952
      %520 = vst.msk [vmem:[%s170] sm:$0x1] %vm519, %v518
      %v521 = vsel %vm504, %v468, -inf
      %v522 = vsel %vm504, %v372, -inf
      %v523 = vsel %vm504, %v471, -inf
      %v524 = vsel %vm504, %v387, -inf
      %v525 = vmax.f32 %v521, %v522
      %v526 = vmax.f32 %v523, %v524
      %v527 = vmax.f32 %v525, %v526
      %v528 = vsel %vm504, %v527, -inf
      %v529 = vrot.slane %v528, 4
      %v530 = vmax.f32 %v528, %v529
      %v531 = vrot.slane %v530, 2
      %v532 = vmax.f32 %v530, %v531
      %v533 = vrot.slane %v532, 1
      %v534 = vmax.f32 %v532, %v533
      %535 = vst.msk [vmem:[%s170 + $0x1] sm:$0x1] %vm519, %v534
      %v536 = vsel %vm504, %v367, -inf
      %v537 = vsel %vm504, %v470, -inf
      %v538 = vsel %vm504, %v382, -inf
      %v539 = vsel %vm504, %v473, -inf
      %v540 = vmax.f32 %v536, %v537
      %v541 = vmax.f32 %v538, %v539
      %v542 = vmax.f32 %v540, %v541
      %v543 = vsel %vm504, %v542, -inf
      %v544 = vrot.slane %v543, 4
      %v545 = vmax.f32 %v543, %v544
      %v546 = vrot.slane %v545, 2
      %v547 = vmax.f32 %v545, %v546
      %v548 = vrot.slane %v547, 1
      %v549 = vmax.f32 %v547, %v548
      %550 = vst.msk [vmem:[%s170 + $0x2] sm:$0x1] %vm519, %v549
      %v551 = vsel %vm504, %v392, -inf
      %v552 = vsel %vm504, %v475, -inf
      %v553 = vsel %vm504, %v407, -inf
      %v554 = vsel %vm504, %v478, -inf
      %v555 = vmax.f32 %v551, %v552
      %v556 = vmax.f32 %v553, %v554
      %v557 = vmax.f32 %v555, %v556
      %v558 = vsel %vm504, %v557, -inf
      %v559 = vrot.slane %v558, 4
      %v560 = vmax.f32 %v558, %v559
      %v561 = vrot.slane %v560, 2
      %v562 = vmax.f32 %v560, %v561
      %v563 = vrot.slane %v562, 1
      %v564 = vmax.f32 %v562, %v563
      %565 = vst.msk [vmem:[%s170 + $0x3] sm:$0x1] %vm519, %v564
      %v566 = vsel %vm504, %v474, -inf
      %v567 = vsel %vm504, %v402, -inf
      %v568 = vsel %vm504, %v477, -inf
      %v569 = vsel %vm504, %v417, -inf
      %v570 = vmax.f32 %v566, %v567
      %v571 = vmax.f32 %v568, %v569
      %v572 = vmax.f32 %v570, %v571
      %v573 = vsel %vm504, %v572, -inf
      %v574 = vrot.slane %v573, 4
      %v575 = vmax.f32 %v573, %v574
      %v576 = vrot.slane %v575, 2
      %v577 = vmax.f32 %v575, %v576
      %v578 = vrot.slane %v577, 1
      %v579 = vmax.f32 %v577, %v578
      %580 = vst.msk [vmem:[%s170 + $0x4] sm:$0x1] %vm519, %v579
      %v581 = vsel %vm504, %v397, -inf
      %v582 = vsel %vm504, %v476, -inf
      %v583 = vsel %vm504, %v412, -inf
      %v584 = vsel %vm504, %v479, -inf
      %v585 = vmax.f32 %v581, %v582
      %v586 = vmax.f32 %v583, %v584
      %v587 = vmax.f32 %v585, %v586
      %v588 = vsel %vm504, %v587, -inf
      %v589 = vrot.slane %v588, 4
      %v590 = vmax.f32 %v588, %v589
      %v591 = vrot.slane %v590, 2
      %v592 = vmax.f32 %v590, %v591
      %v593 = vrot.slane %v592, 1
      %v594 = vmax.f32 %v592, %v593
      %595 = vst.msk [vmem:[%s170 + $0x5] sm:$0x1] %vm519, %v594
      %v596 = vsel %vm504, %v422, -inf
      %v597 = vsel %vm504, %v481, -inf
      %v598 = vsel %vm504, %v437, -inf
      %v599 = vsel %vm504, %v484, -inf
      %v600 = vmax.f32 %v596, %v597
      %v601 = vmax.f32 %v598, %v599
      %v602 = vmax.f32 %v600, %v601
      %v603 = vsel %vm504, %v602, -inf
      %v604 = vrot.slane %v603, 4
      %v605 = vmax.f32 %v603, %v604
      %v606 = vrot.slane %v605, 2
      %v607 = vmax.f32 %v605, %v606
      %v608 = vrot.slane %v607, 1
      %v609 = vmax.f32 %v607, %v608
      %610 = vst.msk [vmem:[%s170 + $0x6] sm:$0x1] %vm519, %v609
      %v611 = vsel %vm504, %v480, -inf
      %v612 = vsel %vm504, %v432, -inf
      %v613 = vsel %vm504, %v483, -inf
      %v614 = vsel %vm504, %v447, -inf
      %v615 = vmax.f32 %v611, %v612
      %v616 = vmax.f32 %v613, %v614
      %v617 = vmax.f32 %v615, %v616
      %v618 = vsel %vm504, %v617, -inf
      %v619 = vrot.slane %v618, 4
      %v620 = vmax.f32 %v618, %v619
      %v621 = vrot.slane %v620, 2
      %v622 = vmax.f32 %v620, %v621
      %v623 = vrot.slane %v622, 1
      %v624 = vmax.f32 %v622, %v623
      %625 = vst.msk [vmem:[%s170 + $0x7] sm:$0x1] %vm519, %v624
      %v626 = vsel %vm504, %v427, -inf
      %v627 = vsel %vm504, %v482, -inf
      %v628 = vsel %vm504, %v442, -inf
      %v629 = vsel %vm504, %v485, -inf
      %v630 = vmax.f32 %v626, %v627
      %v631 = vmax.f32 %v628, %v629
      %v632 = vmax.f32 %v630, %v631
      %v633 = vsel %vm504, %v632, -inf
      %v634 = vrot.slane %v633, 4
      %v635 = vmax.f32 %v633, %v634
      %v636 = vrot.slane %v635, 2
      %v637 = vmax.f32 %v635, %v636
      %v638 = vrot.slane %v637, 1
      %v639 = vmax.f32 %v637, %v638
      %640 = vst.msk [vmem:[%s170 + $0x8] sm:$0x1] %vm519, %v639
      %p641 = scmp.lt.s32.totalorder %s14, 1
      %s642 = scalar_select %p641, %s14, 1
      %s643 = smul.addr %s642, 2
      %s644 = smul.addr %s643, 8
      %s645 = scalar_lea.vmem %s3, %s644
      // Predicated region
      $region33: #{tpu_custom_call.1} parent=31 // pred_check
        %p646 = pneg %p100
      $region34: #{tpu_custom_call.1} parent=31 // pred_check_branch
        %648 = sbr.rel (%p646) target = $region36
      $region35: #{tpu_custom_call.1} parent=31 // pred_region
        _
      $region36: #{tpu_custom_call.1} parent=31 // pred_fallthru
        _
    $region32: #{tpu_custom_call.1} parent=5 // pred_fallthru
      _
    %p649 = scmp.le.s32.totalorder 2, %s9
    // Predicated region
    $region37: #{tpu_custom_call.1} parent=5 // pred_check
      %p650 = pneg %p649
    $region38: #{tpu_custom_call.1} parent=5 // pred_check_branch
      %652 = sbr.rel (%p650) target = $region40
    $region39: #{tpu_custom_call.1} parent=5 // pred_region
      %s653 = ssub.s32 %s9, 2
      // Predicated region
      $region41: #{tpu_custom_call.1} parent=39 // pred_check
        %p654 = pneg %p106
      $region42: #{tpu_custom_call.1} parent=39 // pred_check_branch
        %656 = sbr.rel (%p654) target = $region44
      $region43: #{tpu_custom_call.1} parent=39 // pred_region
        %p657 = scmp.lt.s32.totalorder %s15, 1
        %s658 = scalar_select %p657, %s15, 1
        %s659 = smul.addr %s658, 2
        %s660 = smul.addr %s659, 8
        %s661 = scalar_lea.vmem %s3, %s660
      $region44: #{tpu_custom_call.1} parent=39 // pred_fallthru
        _
    $region40: #{tpu_custom_call.1} parent=5 // pred_fallthru
      _
  $region6: #{tpu_custom_call.1} parent=0 // loop_footer
    %s13 = sadd.s32 1, %s9
  $region7: #{tpu_custom_call.1} parent=0 // loop_footer_branch
    %8 = sbr.rel target = $region3
  $region8: #{tpu_custom_call.1} parent=0 // loop_exit
    _

</llo_original>
